<compile_context>
chip_gen: v7x
topology: tpu7x:2x2x1
jax: 0.10.0
libtpu: 0.0.40
codegen_flags: <defaults>
</compile_context>

<pallas_src>
import functools

import jax
import jax.numpy as jnp
from jax.experimental import pallas as pl
from jax.experimental.pallas import tpu as pltpu

_MiB = 1024 * 1024


# ---------------------------------------------------------------------------
# Hardware queries (generation-aware budgets)
# ---------------------------------------------------------------------------

def _tpu_vmem_capacity_bytes():
    try:
        cap = getattr(pltpu.get_tpu_info(), "vmem_capacity_bytes", None)
        if cap:
            return int(cap)
    except Exception:
        pass
    return 64 * _MiB          # conservative fallback (v7x physical VMEM / TC)


def _num_tensorcores():
    # Best-effort query; 1 is always a safe (v5e/v6e-correct) answer.
    try:
        info = pltpu.get_tpu_info()
        for name in ("num_cores", "core_count", "num_tensorcores", "tensorcore_count"):
            v = getattr(info, name, None)
            if isinstance(v, int) and v > 0:
                return v
    except Exception:
        pass
    return 1


_VMEM_CAP = _tpu_vmem_capacity_bytes()
_VMEM_BUDGET = int(0.70 * _VMEM_CAP)   # ~90 MiB on v5e/v6e, ~45 MiB on v7x
_NUM_TC = _num_tensorcores()


def _sublane_tile(dtype):
    return {4: 8, 2: 16, 1: 32}.get(jnp.dtype(dtype).itemsize, 8)


def _vmem_limit(need):
    return int(min(max(need, 16 * _MiB), int(0.90 * _VMEM_CAP)))


# ---------------------------------------------------------------------------
# Kernels
# ---------------------------------------------------------------------------

def _excite(y, w1_ref, b1_ref, w2t_ref, b2_ref):
    """FC -> ReLU -> FC -> sigmoid on the MXU. y: (1, C) f32 -> gate (1, C) f32."""
    h = jax.lax.dot_general(                       # contract over C (lane axis)
        y, w1_ref[...].astype(jnp.float32),
        dimension_numbers=(((1,), (1,)), ((), ())),
        preferred_element_type=jnp.float32) + b1_ref[...].astype(jnp.float32)
    h = jnp.maximum(h, 0.0)                        # (1, C_red)
    s = jnp.dot(h, w2t_ref[...].astype(jnp.float32),
                preferred_element_type=jnp.float32) + b2_ref[...].astype(jnp.float32)
    return jax.nn.sigmoid(s)                       # (1, C) f32, exp -> EUP


def _se_fused_nchw_kernel(x_ref, w1_ref, b1_ref, w2t_ref, b2_ref, o_ref, *, inv_hw):
    """One grid step == one image. x_ref/o_ref: (1, C, HW), HW on lanes."""
    # Squeeze: f32-accumulated spatial mean (no f32 slab materialization).
    y = jnp.sum(x_ref[...], axis=-1, dtype=jnp.float32) * inv_hw        # (1, C)
    gate = _excite(y, w1_ref, b1_ref, w2t_ref, b2_ref)                  # (1, C) f32
    # Scale in the native dtype; only the gate is cast (once, C values).
    o_ref[...] = x_ref[...] * gate.astype(o_ref.dtype)[:, :, None]


def _se_fused_nhwc_kernel(x_ref, w1_ref, b1_ref, w2t_ref, b2_ref, o_ref, *, inv_hw):
    """One grid step == one image. x_ref/o_ref: (1, HW, C), C on lanes."""
    y = jnp.sum(x_ref[...], axis=1, dtype=jnp.float32) * inv_hw         # (1, C)
    gate = _excite(y, w1_ref, b1_ref, w2t_ref, b2_ref)
    o_ref[...] = x_ref[...] * gate.astype(o_ref.dtype)[:, None, :]


def _pool_nchw_kernel(x_ref, y_ref):
    """Accumulate per-channel spatial sums over the (arbitrary) HW grid axis."""
    @pl.when(pl.program_id(2) == 0)
    def _():
        y_ref[...] = jnp.zeros_like(y_ref)
    y_ref[...] += jnp.sum(x_ref[...], axis=-1, keepdims=True, dtype=jnp.float32)


def _scale_nchw_kernel(x_ref, s_ref, o_ref, *, c_chunk):
    """x:(1,cc,hw) scaled by a slice of the per-image resident (1,C,1) gate."""
    start = pl.multiple_of(pl.program_id(1) * c_chunk, c_chunk)
    gate = s_ref[:, pl.ds(start, c_chunk), :]                            # (1,cc,1) f32
    o_ref[...] = x_ref[...] * gate.astype(o_ref.dtype)


def _pool_nhwc_kernel(x_ref, y_ref):
    @pl.when(pl.program_id(1) == 0)
    def _():
        y_ref[...] = jnp.zeros_like(y_ref)
    y_ref[...] += jnp.sum(x_ref[...], axis=1, keepdims=True, dtype=jnp.float32)


def _scale_nhwc_kernel(x_ref, s_ref, o_ref):
    o_ref[...] = x_ref[...] * s_ref[...].astype(o_ref.dtype)            # (1,1,C) gate


# ---------------------------------------------------------------------------
# Wrappers
# ---------------------------------------------------------------------------

def _full_spec(a):
    # Constant index map -> block is DMA'd once and stays VMEM-resident across
    # the batch grid. (Weights are tiny, so default double-buffering is cheap;
    # the 2x footprint is accounted for in the VMEM estimates.)
    return pl.BlockSpec(a.shape, lambda b: (0,) * a.ndim)


def _excitation_xla(y, w1, b1, w2t, b2):
    """Tiny FC->ReLU->FC->sigmoid between the two passes (plain XLA)."""
    h = jnp.maximum(y @ w1.T + b1, 0.0)
    return jax.nn.sigmoid(h @ w2t + b2)


def _prep_params(w1, b1, w2, b2):
    """Reshape biases, pad C_red to a multiple of 8 (identity), transpose w2
    so both weights keep C on the last (lane) axis."""
    c_red = w1.shape[0]
    pad = (-c_red) % 8
    if pad:
        w1 = jnp.pad(w1, ((0, pad), (0, 0)))
        b1 = jnp.pad(b1, (0, pad))
        w2 = jnp.pad(w2, ((0, 0), (0, pad)))
    w2t = jnp.transpose(w2)                        # (C_red_pad, C)
    return w1, b1.reshape(1, -1), w2t, b2.reshape(1, -1)


def _weight_bytes(*arrs):
    return int(sum(a.size * a.dtype.itemsize for a in arrs))


def _fused_fits(C, HW, isz, wbytes, budget):
    # 2x double-buffered input + 2x double-buffered output + 2x weights + headroom.
    return 4 * C * HW * isz + 2 * wbytes + 2 * _MiB <= budget


def _se_fused(x3, w1, b1r, w2t, b2r, *, nhwc):
    B = x3.shape[0]
    C = x3.shape[2] if nhwc else x3.shape[1]
    HW = x3.shape[1] if nhwc else x3.shape[2]
    isz = x3.dtype.itemsize
    wbytes = _weight_bytes(w1, b1r, w2t, b2r)
    need = 4 * C * HW * isz + 2 * wbytes + 2 * _MiB

    kern = _se_fused_nhwc_kernel if nhwc else _se_fused_nchw_kernel
    kern = functools.partial(kern, inv_hw=1.0 / HW)
    blk = (1, HW, C) if nhwc else (1, C, HW)

    cost = pl.CostEstimate(
        flops=2 * B * C * HW + 4 * B * C * w1.shape[0],
        transcendentals=B * C,
        bytes_accessed=2 * B * C * HW * isz + wbytes)

    return pl.pallas_call(
        kern,
        out_shape=jax.ShapeDtypeStruct(x3.shape, x3.dtype),
        grid=(B,),
        in_specs=[pl.BlockSpec(blk, lambda b: (b, 0, 0)),
                  _full_spec(w1), _full_spec(b1r), _full_spec(w2t), _full_spec(b2r)],
        out_specs=pl.BlockSpec(blk, lambda b: (b, 0, 0)),
        compiler_params=pltpu.CompilerParams(
            dimension_semantics=("parallel",),      # batch shards across TCs
            vmem_limit_bytes=_vmem_limit(need)),
        cost_estimate=cost,
    )(x3, w1, b1r, w2t, b2r)


def _pick_chunks_nchw(C, HW, isz, budget, sub_tile, min_c_splits):
    gate_resident = 2 * C * 128 * 4                 # (1,C,1) gate block, lane-padded

    def est(cc, hw):
        return 4 * cc * hw * isz + gate_resident + 2 * _MiB

    cc_cands = [cc for cc in range(sub_tile, C + 1, sub_tile) if C % cc == 0] or [C]
    if min_c_splits > 1:
        split = [cc for cc in cc_cands if cc <= C // min_c_splits]
        cc_cands = split or cc_cands
    fitting = [cc for cc in cc_cands if est(cc, HW) <= budget]
    if fitting:
        return max(fitting), HW
    cc = cc_cands[0]
    hw_cands = [h for h in range(128, HW, 128) if HW % h == 0]
    fitting = [h for h in hw_cands if est(cc, h) <= budget]
    if fitting:
        return cc, max(fitting)
    # TODO(synk): masked ragged HW tiles when HW has no multiple-of-128 divisor.
    return cc, (min(hw_cands) if hw_cands else HW)


def _se_two_pass_nchw(x3, w1, b1r, w2t, b2r, budget, min_c_splits=1):
    B, C, HW = x3.shape
    isz = x3.dtype.itemsize
    cc, hw = _pick_chunks_nchw(C, HW, isz, budget, _sublane_tile(x3.dtype), min_c_splits)
    n_c, n_hw = C // cc, HW // hw

    x_spec = pl.BlockSpec((1, cc, hw), lambda b, c, h: (b, c, h))
    limit = _vmem_limit(4 * cc * hw * isz + 2 * C * 128 * 4 + 2 * _MiB)

    # Pass 1: per-channel spatial sums, accumulated in f32 over the HW axis.
    ysum = pl.pallas_call(
        _pool_nchw_kernel,
        out_shape=jax.ShapeDtypeStruct((B, C, 1), jnp.float32),
        grid=(B, n_c, n_hw),
        in_specs=[x_spec],
        out_specs=pl.BlockSpec((1, cc, 1), lambda b, c, h: (b, c, 0)),
        compiler_params=pltpu.CompilerParams(
            dimension_semantics=("parallel", "parallel", "arbitrary"),
            vmem_limit_bytes=limit),
        cost_estimate=pl.CostEstimate(flops=B * C * HW, transcendentals=0,
                                      bytes_accessed=B * C * HW * isz + B * C * 4),
    )(x3)

    # Pass 2: tiny excitation MLP in plain XLA (MXU padding kept off the
    # bandwidth-bound Pallas passes).
    gate = _excitation_xla(ysum[:, :, 0] * (1.0 / HW), w1, b1r[0], w2t, b2r[0])
    gate = gate[:, :, None].astype(jnp.float32)

    # Pass 3: lane-dense elementwise scale; gate block resident per image.
    return pl.pallas_call(
        functools.partial(_scale_nchw_kernel, c_chunk=cc),
        out_shape=jax.ShapeDtypeStruct((B, C, HW), x3.dtype),
        grid=(B, n_c, n_hw),
        in_specs=[x_spec, pl.BlockSpec((1, C, 1), lambda b, c, h: (b, 0, 0))],
        out_specs=x_spec,
        compiler_params=pltpu.CompilerParams(
            dimension_semantics=("parallel", "parallel", "parallel"),
            vmem_limit_bytes=limit),
        cost_estimate=pl.CostEstimate(flops=B * C * HW, transcendentals=0,
                                      bytes_accessed=2 * B * C * HW * isz + B * C * 4),
    )(x3, gate)


def _pick_hw_chunk_nhwc(HW, C, isz, budget, min_hw_splits):
    def est(hw):
        return 4 * hw * C * isz + 2 * 8 * C * 4 + 2 * _MiB

    cands = [h for h in range(8, HW + 1, 8) if HW % h == 0] or [HW]
    if min_hw_splits > 1:
        split = [h for h in cands if h <= HW // min_hw_splits]
        cands = split or cands
    fitting = [h for h in cands if est(h) <= budget]
    if fitting:
        return max(fitting)
    return min(cands)   # TODO(synk): masked ragged HW tiles for huge prime-ish HW


def _se_two_pass_nhwc(x3, w1, b1r, w2t, b2r, budget, min_hw_splits=1):
    B, HW, C = x3.shape
    isz = x3.dtype.itemsize
    hw = _pick_hw_chunk_nhwc(HW, C, isz, budget, min_hw_splits)
    n_hw = HW // hw

    x_spec = pl.BlockSpec((1, hw, C), lambda b, h: (b, h, 0))
    s_spec = pl.BlockSpec((1, 1, C), lambda b, h: (b, 0, 0))
    limit = _vmem_limit(4 * hw * C * isz + 2 * _MiB)

    ysum = pl.pallas_call(
        _pool_nhwc_kernel,
        out_shape=jax.ShapeDtypeStruct((B, 1, C), jnp.float32),
        grid=(B, n_hw),
        in_specs=[x_spec],
        out_specs=s_spec,
        compiler_params=pltpu.CompilerParams(
            dimension_semantics=("parallel", "arbitrary"),
            vmem_limit_bytes=limit),
    )(x3)

    gate = _excitation_xla(ysum[:, 0, :] * (1.0 / HW), w1, b1r[0], w2t, b2r[0])
    gate = gate[:, None, :].astype(jnp.float32)

    return pl.pallas_call(
        _scale_nhwc_kernel,
        out_shape=jax.ShapeDtypeStruct((B, HW, C), x3.dtype),
        grid=(B, n_hw),
        in_specs=[x_spec, s_spec],
        out_specs=x_spec,
        compiler_params=pltpu.CompilerParams(
            dimension_semantics=("parallel", "parallel"),
            vmem_limit_bytes=limit),
    )(x3, gate)


def se_layer(x_nchw, w1, b1, w2, b2, *, vmem_budget_bytes=None):
    """SE forward, NCHW layout (matches the PyTorch module).

    For SE stages with HW % 128 != 0 and C % 128 == 0, prefer keeping the
    surrounding model channels-last and calling `se_layer_nhwc` (lane-dense
    stores); this entry point deliberately does not pay an explicit transpose.
    """
    B, C, H, W = x_nchw.shape
    HW = H * W
    x3 = x_nchw.reshape(B, C, HW)                       # HW on the lane axis
    w1p, b1r, w2t, b2r = _prep_params(w1, b1, w2, b2)

    budget = _VMEM_BUDGET if vmem_budget_bytes is None else vmem_budget_bytes
    isz = x3.dtype.itemsize
    wbytes = _weight_bytes(w1p, b1r, w2t, b2r)

    want_split = (_NUM_TC >= 2 and B < _NUM_TC
                  and C >= 2 * _sublane_tile(x3.dtype))   # keep every TC busy (v7x)
    if not want_split and _fused_fits(C, HW, isz, wbytes, budget):
        out3 = _se_fused(x3, w1p, b1r, w2t, b2r, nhwc=False)   # x read from HBM once
    else:
        out3 = _se_two_pass_nchw(x3, w1p, b1r, w2t, b2r, budget,
                                 min_c_splits=_NUM_TC if want_split else 1)
    return out3.reshape(B, C, H, W)


def se_layer_nhwc(x_nhwc, w1, b1, w2, b2, *, vmem_budget_bytes=None):
    """SE forward, channels-last layout (C on the lane axis)."""
    B, H, W, C = x_nhwc.shape
    HW = H * W
    x3 = x_nhwc.reshape(B, HW, C)
    w1p, b1r, w2t, b2r = _prep_params(w1, b1, w2, b2)

    budget = _VMEM_BUDGET if vmem_budget_bytes is None else vmem_budget_bytes
    isz = x3.dtype.itemsize
    wbytes = _weight_bytes(w1p, b1r, w2t, b2r)

    want_split = _NUM_TC >= 2 and B < _NUM_TC and HW % 8 == 0 and HW >= 16
    if not want_split and _fused_fits(C, HW, isz, wbytes, budget):
        out3 = _se_fused(x3, w1p, b1r, w2t, b2r, nhwc=True)
    else:
        out3 = _se_two_pass_nhwc(x3, w1p, b1r, w2t, b2r, budget,
                                 min_hw_splits=_NUM_TC if want_split else 1)
    return out3.reshape(B, H, W, C)


# ---------------------------------------------------------------------------
# Params / reference / test
# ---------------------------------------------------------------------------

def init_params(key, channel, reduction=16):
    # Deterministic PyTorch-Linear-style init: U(-1/sqrt(fan_in), 1/sqrt(fan_in)).
    c_red = channel // reduction
    k1, k2, k3, k4 = jax.random.split(key, 4)
    lim1 = 1.0 / jnp.sqrt(channel)
    lim2 = 1.0 / jnp.sqrt(c_red)
    w1 = jax.random.uniform(k1, (c_red, channel), jnp.float32, -lim1, lim1)
    b1 = jax.random.uniform(k2, (c_red,), jnp.float32, -lim1, lim1)
    w2 = jax.random.uniform(k3, (channel, c_red), jnp.float32, -lim2, lim2)
    b2 = jax.random.uniform(k4, (channel,), jnp.float32, -lim2, lim2)
    return w1, b1, w2, b2


def se_layer_ref(x, w1, b1, w2, b2):
    # Pure-JAX reference (NCHW) for correctness checks.
    y = jnp.mean(x, axis=(2, 3))
    h = jnp.maximum(y @ w1.T + b1, 0.0)
    s = jax.nn.sigmoid(h @ w2.T + b2)
    return x * s[:, :, None, None]


if __name__ == "__main__":
    key = jax.random.PRNGKey(0)
    k_x, k_p, k_x2, k_p2 = jax.random.split(key, 4)

    # ---- NCHW (PyTorch-native layout): channel=32, reduction=16 -> hidden=2.
    B, C, H, W = 2, 32, 16, 16
    x = jax.random.normal(k_x, (B, C, H, W), jnp.float32)
    w1, b1, w2, b2 = init_params(k_p, C, reduction=16)
    ref = se_layer_ref(x, w1, b1, w2, b2)

    out = jax.block_until_ready(se_layer(x, w1, b1, w2, b2))          # fused path
    assert out.shape == (B, C, H, W)
    assert jnp.allclose(out, ref, atol=1e-5, rtol=1e-5)

    out_b1 = jax.block_until_ready(se_layer(x[:1], w1, b1, w2, b2))   # B==1 routing
    assert jnp.allclose(out_b1, ref[:1], atol=1e-5, rtol=1e-5)

    out_tp = jax.block_until_ready(                                   # forced two-pass
        se_layer(x, w1, b1, w2, b2, vmem_budget_bytes=1))
    assert jnp.allclose(out_tp, ref, atol=1e-5, rtol=1e-5)

    xb = x.astype(jnp.bfloat16)                                       # bf16, native-dtype scale
    out_bf = jax.block_until_ready(se_layer(xb, w1, b1, w2, b2))
    ref_bf = se_layer_ref(xb.astype(jnp.float32), w1, b1, w2, b2)
    assert jnp.allclose(out_bf.astype(jnp.float32), ref_bf, atol=3e-2, rtol=3e-2)

    # ---- NHWC (channels-last) at a 7x7 SE stage: HW=49, C=128 (lane-dense).
    Bn, Hn, Wn, Cn = 2, 7, 7, 128
    xn = jax.random.normal(k_x2, (Bn, Hn, Wn, Cn), jnp.float32)
    w1n, b1n, w2n, b2n = init_params(k_p2, Cn, reduction=16)
    refn = jnp.transpose(
        se_layer_ref(jnp.transpose(xn, (0, 3, 1, 2)), w1n, b1n, w2n, b2n),
        (0, 2, 3, 1))

    outn = jax.block_until_ready(se_layer_nhwc(xn, w1n, b1n, w2n, b2n))
    assert jnp.allclose(outn, refn, atol=1e-5, rtol=1e-5)
    outn_tp = jax.block_until_ready(
        se_layer_nhwc(xn, w1n, b1n, w2n, b2n, vmem_budget_bytes=1))
    assert jnp.allclose(outn_tp, refn, atol=1e-5, rtol=1e-5)

    print("KERNEL_OK")
</pallas_src>

<mosaic_0001>
module attributes {stable_mosaic.version = 11 : i64} {
  func.func @_se_fused_nchw_kernel(%arg0: i32, %arg1: memref<1x32x256xf32, #tpu.memory_space<vmem>>, %arg2: memref<8x32xf32, #tpu.memory_space<vmem>>, %arg3: memref<1x8xf32, #tpu.memory_space<vmem>>, %arg4: memref<8x32xf32, #tpu.memory_space<vmem>>, %arg5: memref<1x32xf32, #tpu.memory_space<vmem>>, %arg6: memref<1x32x256xf32, #tpu.memory_space<vmem>>) attributes {dimension_semantics = [#tpu.dimension_semantics<parallel>], iteration_bounds = array<i64: 2>, scalar_prefetch = 0 : i64, scratch_operands = 0 : i64, tpu.core_type = #tpu.core_type<tc>, window_params = [{transform_indices = @transform_0, window_bounds = array<i64: 1, 32, 256>}, {pipeline_mode = #tpu.pipeline_mode<synchronous>, transform_indices = @transform_1, window_bounds = array<i64: 8, 32>}, {pipeline_mode = #tpu.pipeline_mode<synchronous>, transform_indices = @transform_2, window_bounds = array<i64: 1, 8>}, {pipeline_mode = #tpu.pipeline_mode<synchronous>, transform_indices = @transform_3, window_bounds = array<i64: 8, 32>}, {pipeline_mode = #tpu.pipeline_mode<synchronous>, transform_indices = @transform_4, window_bounds = array<i64: 1, 32>}, {transform_indices = @transform_5, window_bounds = array<i64: 1, 32, 256>}]} {
    %c0 = arith.constant 0 : index
    %c0_0 = arith.constant 0 : index
    %c0_1 = arith.constant 0 : index
    %0 = vector.load %arg1[%c0, %c0_0, %c0_1] : memref<1x32x256xf32, #tpu.memory_space<vmem>>, vector<1x32x256xf32>
    %cst = arith.constant dense<0.000000e+00> : vector<1x32xf32>
    %1 = vector.multi_reduction <add>, %0, %cst [2] : vector<1x32x256xf32> to vector<1x32xf32>
    %cst_2 = arith.constant 3.906250e-03 : f32
    %2 = vector.broadcast %cst_2 : f32 to vector<1x32xf32>
    %3 = arith.mulf %1, %2 : vector<1x32xf32>
    %c0_3 = arith.constant 0 : index
    %c0_4 = arith.constant 0 : index
    %4 = vector.load %arg2[%c0_3, %c0_4] : memref<8x32xf32, #tpu.memory_space<vmem>>, vector<8x32xf32>
    %cst_5 = arith.constant dense<0.000000e+00> : vector<1x8xf32>
    %5 = tpu.matmul %3, %4, %cst_5 {dimension_numbers = #tpu.dot_dimension_numbers<[1], [1], [0], [0], [0, 0, 1, 0], [], []>} : vector<1x32xf32>, vector<8x32xf32>, vector<1x8xf32> -> vector<1x8xf32>
    %c0_6 = arith.constant 0 : index
    %c0_7 = arith.constant 0 : index
    %6 = vector.load %arg3[%c0_6, %c0_7] : memref<1x8xf32, #tpu.memory_space<vmem>>, vector<1x8xf32>
    %7 = arith.addf %5, %6 : vector<1x8xf32>
    %cst_8 = arith.constant 0.000000e+00 : f32
    %8 = vector.broadcast %cst_8 : f32 to vector<1x8xf32>
    %9 = arith.maximumf %7, %8 : vector<1x8xf32>
    %c0_9 = arith.constant 0 : index
    %c0_10 = arith.constant 0 : index
    %10 = vector.load %arg4[%c0_9, %c0_10] : memref<8x32xf32, #tpu.memory_space<vmem>>, vector<8x32xf32>
    %cst_11 = arith.constant dense<0.000000e+00> : vector<1x32xf32>
    %11 = tpu.matmul %9, %10, %cst_11 {dimension_numbers = #tpu.dot_dimension_numbers<[1], [0], [0], [1], [0, 0, 1, 1], [], []>} : vector<1x8xf32>, vector<8x32xf32>, vector<1x32xf32> -> vector<1x32xf32>
    %c0_12 = arith.constant 0 : index
    %c0_13 = arith.constant 0 : index
    %12 = vector.load %arg5[%c0_12, %c0_13] : memref<1x32xf32, #tpu.memory_space<vmem>>, vector<1x32xf32>
    %13 = arith.addf %11, %12 : vector<1x32xf32>
    %14 = arith.negf %13 : vector<1x32xf32>
    %15 = math.exp %14 : vector<1x32xf32>
    %cst_14 = arith.constant 1.000000e+00 : f32
    %16 = vector.broadcast %cst_14 : f32 to vector<1x32xf32>
    %17 = arith.addf %16, %15 : vector<1x32xf32>
    %18 = arith.divf %16, %17 : vector<1x32xf32>
    %c0_15 = arith.constant 0 : index
    %c0_16 = arith.constant 0 : index
    %c0_17 = arith.constant 0 : index
    %19 = vector.load %arg1[%c0_15, %c0_16, %c0_17] : memref<1x32x256xf32, #tpu.memory_space<vmem>>, vector<1x32x256xf32>
    %20 = vector.shape_cast %18 : vector<1x32xf32> to vector<1x32x1xf32>
    %21 = vector.broadcast %20 : vector<1x32x1xf32> to vector<1x32x256xf32>
    %22 = arith.mulf %19, %21 : vector<1x32x256xf32>
    %c0_18 = arith.constant 0 : index
    %c0_19 = arith.constant 0 : index
    %c0_20 = arith.constant 0 : index
    %23 = vector.load %arg6[%c0_18, %c0_19, %c0_20] : memref<1x32x256xf32, #tpu.memory_space<vmem>>, vector<1x32x256xf32>
    tpu.vector_store %arg6[%c0_18, %c0_19, %c0_20], %22 {strides = array<i32>} : memref<1x32x256xf32, #tpu.memory_space<vmem>>, vector<1x32x256xf32>,
    return
  }
  func.func @transform_0(%arg0: i32) -> (i32, i32, i32) {
    %c0_i32 = arith.constant 0 : i32
    %c0_i32_0 = arith.constant 0 : i32
    %c0_i32_1 = arith.constant 0 : i32
    return %arg0, %c0_i32, %c0_i32_0 : i32, i32, i32
  }
  func.func @transform_1(%arg0: i32) -> (i32, i32) {
    %c0_i32 = arith.constant 0 : i32
    %c0_i32_0 = arith.constant 0 : i32
    %c0_i32_1 = arith.constant 0 : i32
    return %c0_i32, %c0_i32_0 : i32, i32
  }
  func.func @transform_2(%arg0: i32) -> (i32, i32) {
    %c0_i32 = arith.constant 0 : i32
    %c0_i32_0 = arith.constant 0 : i32
    %c0_i32_1 = arith.constant 0 : i32
    return %c0_i32, %c0_i32_0 : i32, i32
  }
  func.func @transform_3(%arg0: i32) -> (i32, i32) {
    %c0_i32 = arith.constant 0 : i32
    %c0_i32_0 = arith.constant 0 : i32
    %c0_i32_1 = arith.constant 0 : i32
    return %c0_i32, %c0_i32_0 : i32, i32
  }
  func.func @transform_4(%arg0: i32) -> (i32, i32) {
    %c0_i32 = arith.constant 0 : i32
    %c0_i32_0 = arith.constant 0 : i32
    %c0_i32_1 = arith.constant 0 : i32
    return %c0_i32, %c0_i32_0 : i32, i32
  }
  func.func @transform_5(%arg0: i32) -> (i32, i32, i32) {
    %c0_i32 = arith.constant 0 : i32
    %c0_i32_0 = arith.constant 0 : i32
    %c0_i32_1 = arith.constant 0 : i32
    return %arg0, %c0_i32, %c0_i32_0 : i32, i32, i32
  }
}

</mosaic_0001>

<llo_original>
// kernel: tpu_custom_call.1
$region0: #{tpu_custom_call.1}
  #allocation0 [shape = 'u32[]', space=smem, size = 0x4, offset = 0x4, fixed_abs, tag = 'smem constant byte address 0x4 - core index']
  #allocation1 [shape = 'u32[144,128]{1,0:T(1,128)}', space=vmem, size = 0x12000, scoped, tag = 'internal scratch']
  %s0 = inlined_call_operand.hbm [shape: f32[2,32,256], index: 0, kind: input, shape index: {}]
  %s1 = inlined_call_operand.hbm [shape: f32[8,32], index: 1, kind: input, shape index: {}]
  %s2 = inlined_call_operand.vmem [shape: f32[1,8], index: 2, kind: input, shape index: {}]
  %s3 = inlined_call_operand.vmem [shape: f32[8,32], index: 3, kind: input, shape index: {}]
  %s4 = inlined_call_operand.vmem [shape: f32[1,32], index: 4, kind: input, shape index: {}]
  %s5 = inlined_call_operand.hbm [shape: f32[2,32,256], index: 5, kind: output, shape index: {}]
  %s6 = sld [smem:[#allocation0]]
  $region61: #{tpu_custom_call.1} parent=0
    _
  %s8 = ssub.s32 1, %s6
  %s9 = scalar_select 0, %s8, %s6
  $region1: #{tpu_custom_call.1} parent=0
    #allocation2 [shape = 'u8[65536]{0}', space=vmem, size = 0x10000, scoped, tag = 'input window, operand 0']
    #allocation3 [shape = 's32[2]{0}', space=sflag, size = 0x8, scoped, tag = 'scoped memory for tpu_custom_call.1']
    #allocation4 [shape = 's32[2]{0}', space=sflag, size = 0x8, scoped, tag = 'scoped memory for tpu_custom_call.1']
    #allocation5 [shape = 'u8[4096]{0}', space=vmem, size = 0x1000, scoped, tag = 'input window, operand 1, single buffered']
    #allocation6 [shape = 's32[1]{0}', space=sflag, size = 0x4, scoped, tag = 'scoped memory for tpu_custom_call.1']
    #allocation7 [shape = 'u8[65536]{0}', space=vmem, size = 0x10000, scoped, tag = 'output window, operand 0']
    %10 = vsyncpa [#allocation3], 0
    %s11 = scalar_lea.sflag [#allocation3], 1
    %12 = vsyncpa %s11, 0
    %13 = vsyncpa [#allocation6], 0
    %14 = vsyncpa [#allocation4], 0
    %s15 = scalar_lea.sflag [#allocation4], 1
    %16 = vsyncpa %s15, 0
    loop: start=0, step=1, limit=4
    $region2: #{tpu_custom_call.1} parent=1 // loop_pre_header
      _
    $region3: #{tpu_custom_call.1} parent=1 // loop_header
      %s18 = sphi 0, %s22
      %p19 = scmp.ge.s32.totalorder %s18, 4
      %s28 = sphi 0, %s30
      %s31 = sphi 0, %s28
      %s32 = sphi 0, %s31
      %s48 = sphi 0, %s32
      %s52 = sphi 0, %s52
      %s54 = sphi 0, %s52
      %s55 = sphi 0, %s54
      %s69 = sphi 0, %s55
      %s73 = sphi 0, %s73
      %s75 = sphi 0, %s73
      %s76 = sphi 0, %s75
      %s90 = sphi 0, %s76
      %s94 = sphi 0, %s94
      %s96 = sphi 0, %s94
      %s97 = sphi 0, %s96
      %s111 = sphi 0, %s97
      %s115 = sphi 0, %s115
      %s117 = sphi 0, %s115
      %s118 = sphi 0, %s117
      %s132 = sphi 0, %s118
      %s138 = sphi 0, %s140
      %s141 = sphi 0, %s138
      %s142 = sphi 0, %s141
      %s158 = sphi 0, %s142
    $region4: #{tpu_custom_call.1} parent=1 // loop_header_branch
      %21 = sbr.rel (%p19) target = $region8
    $region5: #{tpu_custom_call.1} parent=1 // loop_body
      %s23 = ssub.s32 %s18, 1
      %s24 = ssub.s32 %s18, 2
      %s25 = sadd.s32 %s18, 1
      %s26 = ssub.s32 %s18, %s25
      %p27 = scmp.eq.s32.totalorder %s26, 0
      %s29 = sadd.s32 %s28, 1
      %s30 = scalar_select %p27, %s28, %s29
      %p33 = pneg %p27
      %p34 = scmp.eq.s32.totalorder %s18, 1
      %p35 = por %p33, %p34
      %p36 = scmp.ne.s32.totalorder %s28, %s31
      %p37 = scmp.eq.s32.totalorder %s18, 0
      %p38 = por %p36, %p37
      %p39 = scmp.ne.s32.totalorder %s28, %s31
      %p40 = scmp.eq.s32.totalorder %s23, 1
      %p41 = por %p39, %p40
      %p42 = scmp.ne.s32.totalorder %s31, %s32
      %p43 = scmp.eq.s32.totalorder %s23, 0
      %p44 = por %p42, %p43
      %p45 = scmp.ne.s32.totalorder %s31, %s32
      %p46 = scmp.eq.s32.totalorder %s24, 1
      %p47 = por %p45, %p46
      %p49 = scmp.ne.s32.totalorder %s32, %s48
      %p50 = scmp.eq.s32.totalorder %s24, 0
      %p51 = por %p49, %p50
      %s53 = sadd.s32 %s52, 1
      %p56 = scmp.eq.s32.totalorder %s18, 1
      %p57 = scmp.ne.s32.totalorder %s52, %s54
      %p58 = scmp.eq.s32.totalorder %s18, 0
      %p59 = por %p57, %p58
      %p60 = scmp.ne.s32.totalorder %s52, %s54
      %p61 = scmp.eq.s32.totalorder %s23, 1
      %p62 = por %p60, %p61
      %p63 = scmp.ne.s32.totalorder %s54, %s55
      %p64 = scmp.eq.s32.totalorder %s23, 0
      %p65 = por %p63, %p64
      %p66 = scmp.ne.s32.totalorder %s54, %s55
      %p67 = scmp.eq.s32.totalorder %s24, 1
      %p68 = por %p66, %p67
      %p70 = scmp.ne.s32.totalorder %s55, %s69
      %p71 = scmp.eq.s32.totalorder %s24, 0
      %p72 = por %p70, %p71
      %s74 = sadd.s32 %s73, 1
      %p77 = scmp.eq.s32.totalorder %s18, 1
      %p78 = scmp.ne.s32.totalorder %s73, %s75
      %p79 = scmp.eq.s32.totalorder %s18, 0
      %p80 = por %p78, %p79
      %p81 = scmp.ne.s32.totalorder %s73, %s75
      %p82 = scmp.eq.s32.totalorder %s23, 1
      %p83 = por %p81, %p82
      %p84 = scmp.ne.s32.totalorder %s75, %s76
      %p85 = scmp.eq.s32.totalorder %s23, 0
      %p86 = por %p84, %p85
      %p87 = scmp.ne.s32.totalorder %s75, %s76
      %p88 = scmp.eq.s32.totalorder %s24, 1
      %p89 = por %p87, %p88
      %p91 = scmp.ne.s32.totalorder %s76, %s90
      %p92 = scmp.eq.s32.totalorder %s24, 0
      %p93 = por %p91, %p92
      %s95 = sadd.s32 %s94, 1
      %p98 = scmp.eq.s32.totalorder %s18, 1
      %p99 = scmp.ne.s32.totalorder %s94, %s96
      %p100 = scmp.eq.s32.totalorder %s18, 0
      %p101 = por %p99, %p100
      %p102 = scmp.ne.s32.totalorder %s94, %s96
      %p103 = scmp.eq.s32.totalorder %s23, 1
      %p104 = por %p102, %p103
      %p105 = scmp.ne.s32.totalorder %s96, %s97
      %p106 = scmp.eq.s32.totalorder %s23, 0
      %p107 = por %p105, %p106
      %p108 = scmp.ne.s32.totalorder %s96, %s97
      %p109 = scmp.eq.s32.totalorder %s24, 1
      %p110 = por %p108, %p109
      %p112 = scmp.ne.s32.totalorder %s97, %s111
      %p113 = scmp.eq.s32.totalorder %s24, 0
      %p114 = por %p112, %p113
      %s116 = sadd.s32 %s115, 1
      %p119 = scmp.eq.s32.totalorder %s18, 1
      %p120 = scmp.ne.s32.totalorder %s115, %s117
      %p121 = scmp.eq.s32.totalorder %s18, 0
      %p122 = por %p120, %p121
      %p123 = scmp.ne.s32.totalorder %s115, %s117
      %p124 = scmp.eq.s32.totalorder %s23, 1
      %p125 = por %p123, %p124
      %p126 = scmp.ne.s32.totalorder %s117, %s118
      %p127 = scmp.eq.s32.totalorder %s23, 0
      %p128 = por %p126, %p127
      %p129 = scmp.ne.s32.totalorder %s117, %s118
      %p130 = scmp.eq.s32.totalorder %s24, 1
      %p131 = por %p129, %p130
      %p133 = scmp.ne.s32.totalorder %s118, %s132
      %p134 = scmp.eq.s32.totalorder %s24, 0
      %p135 = por %p133, %p134
      %s136 = ssub.s32 %s18, %s25
      %p137 = scmp.eq.s32.totalorder %s136, 0
      %s139 = sadd.s32 %s138, 1
      %s140 = scalar_select %p137, %s138, %s139
      %p143 = pneg %p137
      %p144 = scmp.eq.s32.totalorder %s18, 1
      %p145 = por %p143, %p144
      %p146 = scmp.ne.s32.totalorder %s138, %s141
      %p147 = scmp.eq.s32.totalorder %s18, 0
      %p148 = por %p146, %p147
      %p149 = scmp.ne.s32.totalorder %s138, %s141
      %p150 = scmp.eq.s32.totalorder %s23, 1
      %p151 = por %p149, %p150
      %p152 = scmp.ne.s32.totalorder %s141, %s142
      %p153 = scmp.eq.s32.totalorder %s23, 0
      %p154 = por %p152, %p153
      %p155 = scmp.ne.s32.totalorder %s141, %s142
      %p156 = scmp.eq.s32.totalorder %s24, 1
      %p157 = por %p155, %p156
      %p159 = scmp.ne.s32.totalorder %s142, %s158
      %p160 = scmp.eq.s32.totalorder %s24, 0
      %p161 = por %p159, %p160
      %p162 = scmp.le.s32.totalorder 1, %s18
      %p163 = scmp.lt.s32.totalorder %s18, 3
      %p164 = pnand %p162, %p163
      %p165 = pneg %p164
      // Predicated region
      $region9: #{tpu_custom_call.1} parent=5 // pred_check
        _
      $region10: #{tpu_custom_call.1} parent=5 // pred_check_branch
        %167 = sbr.rel (%p164) target = $region12
      $region11: #{tpu_custom_call.1} parent=5 // pred_region
        %s168 = ssub.s32 %s18, 1
        // Predicated region
        $region13: #{tpu_custom_call.1} parent=11 // pred_check
          %p169 = pneg %p65
        $region14: #{tpu_custom_call.1} parent=11 // pred_check_branch
          %171 = sbr.rel (%p169) target = $region16
        $region15: #{tpu_custom_call.1} parent=11 // pred_region
          %s173 = ssub.s32 128, 128
          %174 = vsyncadd [#allocation6], %s173
          %s176 = sshll.u32 [#allocation5], 4
          %s177 = int_to_ptr.vmem [resolvable:$true] %s176
          %179 = dma.hbm_to_vmem [thread:$0]  %s1, 128, %s177, [#allocation6]
        $region16: #{tpu_custom_call.1} parent=11 // pred_fallthru
          _
        // Predicated region
        $region17: #{tpu_custom_call.1} parent=11 // pred_check
          %p180 = pneg %p86
        $region18: #{tpu_custom_call.1} parent=11 // pred_check_branch
          %182 = sbr.rel (%p180) target = $region20
        $region19: #{tpu_custom_call.1} parent=11 // pred_region
          _
        $region20: #{tpu_custom_call.1} parent=11 // pred_fallthru
          _
        // Predicated region
        $region21: #{tpu_custom_call.1} parent=11 // pred_check
          %p183 = pneg %p107
        $region22: #{tpu_custom_call.1} parent=11 // pred_check_branch
          %185 = sbr.rel (%p183) target = $region24
        $region23: #{tpu_custom_call.1} parent=11 // pred_region
          _
        $region24: #{tpu_custom_call.1} parent=11 // pred_fallthru
          _
        // Predicated region
        $region25: #{tpu_custom_call.1} parent=11 // pred_check
          %p186 = pneg %p128
        $region26: #{tpu_custom_call.1} parent=11 // pred_check_branch
          %188 = sbr.rel (%p186) target = $region28
        $region27: #{tpu_custom_call.1} parent=11 // pred_region
          _
        $region28: #{tpu_custom_call.1} parent=11 // pred_fallthru
          _
      $region12: #{tpu_custom_call.1} parent=5 // pred_fallthru
        _
      %p189 = scmp.lt.s32.totalorder %s18, 2
      // Predicated region
      $region29: #{tpu_custom_call.1} parent=5 // pred_check
        %p190 = pneg %p189
      $region30: #{tpu_custom_call.1} parent=5 // pred_check_branch
        %192 = sbr.rel (%p190) target = $region32
      $region31: #{tpu_custom_call.1} parent=5 // pred_region
        // Predicated region
        $region33: #{tpu_custom_call.1} parent=31 // pred_check
          %p193 = pneg %p38
        $region34: #{tpu_custom_call.1} parent=31 // pred_check_branch
          %195 = sbr.rel (%p193) target = $region36
        $region35: #{tpu_custom_call.1} parent=31 // pred_region
          %s196 = sand.u32 %s28, 1
          %s197 = scalar_lea.sflag [#allocation3], %s196
          %s198 = sand.u32 %s28, 1
          %s199 = smul.addr %s198, 64
          %s200 = scalar_lea.vmem [#allocation2], %s199
          %s202 = ssub.s32 1024, 1024
          %203 = vsyncadd %s197, %s202
          %s204 = smul.addr %s18, 8
          %s205 = smul.addr %s204, 128
          %s206 = scalar_lea.hbm %s0, %s205
          %s207 = sshll.u32 %s200, 4
          %s208 = int_to_ptr.vmem [resolvable:$true] %s207
          %213 = dma.hbm_to_vmem [thread:$0]  %s206, 1024, %s208, %s197, 256, 256, 16
        $region36: #{tpu_custom_call.1} parent=31 // pred_fallthru
          _
      $region32: #{tpu_custom_call.1} parent=5 // pred_fallthru
        _
      %p214 = scmp.le.s32.totalorder 1, %s18
      %p215 = scmp.lt.s32.totalorder %s18, 3
      %p216 = pnand %p214, %p215
      %p217 = pneg %p216
      // Predicated region
      $region37: #{tpu_custom_call.1} parent=5 // pred_check
        _
      $region38: #{tpu_custom_call.1} parent=5 // pred_check_branch
        %219 = sbr.rel (%p216) target = $region40
      $region39: #{tpu_custom_call.1} parent=5 // pred_region
        %s220 = ssub.s32 %s18, 1
        %s221 = sand.u32 %s31, 1
        %s222 = scalar_lea.sflag [#allocation3], %s221
        %s223 = sand.u32 %s31, 1
        %s224 = smul.addr %s223, 64
        %s225 = scalar_lea.vmem [#allocation2], %s224
        // Predicated region
        $region41: #{tpu_custom_call.1} parent=39 // pred_check
          %p226 = pneg %p44
        $region42: #{tpu_custom_call.1} parent=39 // pred_check_branch
          %228 = sbr.rel (%p226) target = $region44
        $region43: #{tpu_custom_call.1} parent=39 // pred_region
          %229 = dma.done %s222, 1024
        $region44: #{tpu_custom_call.1} parent=39 // pred_fallthru
          _
        // Predicated region
        $region45: #{tpu_custom_call.1} parent=39 // pred_check
          %p230 = pneg %p65
        $region46: #{tpu_custom_call.1} parent=39 // pred_check_branch
          %232 = sbr.rel (%p230) target = $region48
        $region47: #{tpu_custom_call.1} parent=39 // pred_region
          %233 = dma.done [#allocation6], 128
        $region48: #{tpu_custom_call.1} parent=39 // pred_fallthru
          _
        %s234 = sand.u32 %s31, 1
        %s235 = scalar_lea.sflag [#allocation3], %s234
        %s236 = sand.u32 %s31, 1
        %s237 = smul.addr %s236, 64
        %s238 = scalar_lea.vmem [#allocation2], %s237
        %p239 = pneg %p44
        %p240 = pneg %p41
        %p241 = pneg %p65
        %p242 = pneg %p62
        %p243 = pneg %p86
        %p244 = pneg %p83
        %p245 = pneg %p107
        %p246 = pneg %p104
        %p247 = pneg %p128
        %p248 = pneg %p125
        %p249 = pneg %p154
        %p250 = pneg %p151
        %s251 = sand.u32 %s141, 1
        %s252 = scalar_lea.sflag [#allocation4], %s251
        %s253 = sand.u32 %s141, 1
        %s254 = smul.addr %s253, 64
        %s255 = scalar_lea.vmem [#allocation7], %s254
        %v256 = vld [vmem:[%s225] sm:$0xff]
        %v257 = vld [vmem:[%s225 + $0x8] sm:$0xff]
        %v258 = vld [vmem:[%s225 + $0x10] sm:$0xff]
        %v259 = vld [vmem:[%s225 + $0x18] sm:$0xff]
        %v260 = vld [vmem:[%s225 + $0x20] sm:$0xff]
        %v261 = vld [vmem:[%s225 + $0x28] sm:$0xff]
        %v262 = vld [vmem:[%s225 + $0x30] sm:$0xff]
        %v263 = vld [vmem:[%s225 + $0x38] sm:$0xff]
        %v264 = vadd.f32 %v256, %v257
        %265 = vadd.xlane.f32.xlu0 %v264
        %v266 = vpop.xlane.xlu0 %265
        %v267 = vadd.f32 %v258, %v259
        %268 = vadd.xlane.f32.xlu0 %v267
        %v269 = vpop.xlane.xlu0 %268
        %v270 = vadd.f32 %v260, %v261
        %271 = vadd.xlane.f32.xlu0 %v270
        %v272 = vpop.xlane.xlu0 %271
        %v273 = vadd.f32 %v262, %v263
        %274 = vadd.xlane.f32.xlu0 %v273
        %v275 = vpop.xlane.xlu0 %274
        %v276 = vmul.f32 %v266, 0.00390625
        %v277 = vmul.f32 %v269, 0.00390625
        %v278 = vmul.f32 %v272, 0.00390625
        %v279 = vmul.f32 %v275, 0.00390625
        %v280 = vld [vmem:[#allocation5] sm:$0xff]
        %v281 = vld [vmem:[%s2] sm:$0x1]
        %v286 = vlaneseq
        %v287 = vand.u32 %v286, 127
        %v288 = vlaneseq
        %v289 = vshrl.u32 %v288, 7
        %v290 = vsub.s32 %v287, %v289
        %v291 = vrot.slane %v276, %v290
        %v292 = vadd.s32 %v287, 4294967288
        %v293 = vlaneseq
        %v294 = vshrl.u32 %v293, 7
        %v295 = vsub.s32 %v292, %v294
        %v296 = vrot.slane %v277, %v295
        %vm297 = vcmask 130112
        %v298 = vsel %vm297, %v296, %v291
        %v299 = vadd.s32 %v287, 4294967280
        %v300 = vlaneseq
        %v301 = vshrl.u32 %v300, 7
        %v302 = vsub.s32 %v299, %v301
        %v303 = vrot.slane %v278, %v302
        %vm304 = vcmask 195712
        %v305 = vsel %vm304, %v303, %v298
        %v306 = vadd.s32 %v287, 4294967272
        %v307 = vlaneseq
        %v308 = vshrl.u32 %v307, 7
        %v309 = vsub.s32 %v306, %v308
        %v310 = vrot.slane %v279, %v309
        %vm311 = vcmask 261312
        %v312 = vsel %vm311, %v310, %v305
        %vm313 = vcmask 261120
        %v314 = vsel %vm313, %v312, 0
        %v317 = vsel %vm313, %v280, 0
        %319 = vmatprep.subr.mxu0 0.0
        %320 = vmatpush1.xpose.msra.mxu0 %v317
        %321 = vmatprep.subr.mxu0 0.0
        %322 = vmatpush1.xpose.msra.mxu0 0.0
        %323 = vmatprep.subr.mxu0 0.0
        %324 = vmatpush1.xpose.msra.mxu0 0.0
        %325 = vmatprep.subr.mxu0 0.0
        %326 = vmatpush1.xpose.msra.mxu0 0.0
        %327 = vmatprep.subr.mxu0 0.0
        %328 = vmatpush1.xpose.msra.mxu0 0.0
        %329 = vmatprep.subr.mxu0 0.0
        %330 = vmatpush1.xpose.msra.mxu0 0.0
        %331 = vmatprep.subr.mxu0 0.0
        %332 = vmatpush1.xpose.msra.mxu0 0.0
        %333 = vmatprep.subr.mxu0 0.0
        %334 = vmatpush1.xpose.msra.mxu0 0.0
        %335 = vmatprep.subr.mxu0 0.0
        %336 = vmatpush1.xpose.msra.mxu0 0.0
        %337 = vmatprep.subr.mxu0 0.0
        %338 = vmatpush1.xpose.msra.mxu0 0.0
        %339 = vmatprep.subr.mxu0 0.0
        %340 = vmatpush1.xpose.msra.mxu0 0.0
        %341 = vmatprep.subr.mxu0 0.0
        %342 = vmatpush1.xpose.msra.mxu0 0.0
        %343 = vmatprep.subr.mxu0 0.0
        %344 = vmatpush1.xpose.msra.mxu0 0.0
        %345 = vmatprep.subr.mxu0 0.0
        %346 = vmatpush1.xpose.msra.mxu0 0.0
        %347 = vmatprep.subr.mxu0 0.0
        %348 = vmatpush1.xpose.msra.mxu0 0.0
        %349 = vmatprep.subr.mxu0 0.0
        %350 = vmatpush1.xpose.msra.mxu0 0.0
        %351 = vmatprep.subr.mxu0 0.0
        %352 = vmatpush1.xpose.msra.mxu0 0.0
        %353 = vmatprep.subr.mxu0 0.0
        %354 = vmatpush1.xpose.msra.mxu0 0.0
        %355 = vmatprep.subr.mxu0 0.0
        %356 = vmatpush1.xpose.msra.mxu0 0.0
        %357 = vmatprep.subr.mxu0 0.0
        %358 = vmatpush1.xpose.msra.mxu0 0.0
        %359 = vmatprep.subr.mxu0 0.0
        %360 = vmatpush1.xpose.msra.mxu0 0.0
        %361 = vmatprep.subr.mxu0 0.0
        %362 = vmatpush1.xpose.msra.mxu0 0.0
        %363 = vmatprep.subr.mxu0 0.0
        %364 = vmatpush1.xpose.msra.mxu0 0.0
        %365 = vmatprep.subr.mxu0 0.0
        %366 = vmatpush1.xpose.msra.mxu0 0.0
        %367 = vmatprep.subr.mxu0 0.0
        %368 = vmatpush1.xpose.msra.mxu0 0.0
        %369 = vmatprep.subr.mxu0 0.0
        %370 = vmatpush1.xpose.msra.mxu0 0.0
        %371 = vmatprep.subr.mxu0 0.0
        %372 = vmatpush1.xpose.msra.mxu0 0.0
        %373 = vmatprep.subr.mxu0 0.0
        %374 = vmatpush1.xpose.msra.mxu0 0.0
        %375 = vmatprep.subr.mxu0 0.0
        %376 = vmatpush1.xpose.msra.mxu0 0.0
        %377 = vmatprep.subr.mxu0 0.0
        %378 = vmatpush1.xpose.msra.mxu0 0.0
        %379 = vmatprep.subr.mxu0 0.0
        %380 = vmatpush1.xpose.msra.mxu0 0.0
        %381 = vmatprep.subr.mxu0 0.0
        %382 = vmatpush1.xpose.msra.mxu0 0.0
        %383 = vmatprep.mubr.f32.mxu0 0.0
        %384 = vmatmul.mubr.f32.gmra.mrb[0].mxu0 %v314
        %v385 = vpop.f32.mrb[0].mxu0
        %v386 = vadd.f32 %v281, %v385
        %v387 = vpop.f32.mrb[0].mxu0
        %388 = vdwg.mxu0
        %v389 = vmax.f32 %v386, 0.0
        %v390 = vld [vmem:[%s3] sm:$0xff]
        %v391 = vld [vmem:[%s4] sm:$0x1]
        %vm392 = vcmask 64512
        %v394 = vsel %vm392, %v389, 0
        %396 = vmatprep.subr.mxu0 0.0
        %397 = vmatpush1.msra.mxu0 %v390
        %398 = vmatprep.subr.mxu0 0.0
        %399 = vmatpush1.msra.mxu0 0.0
        %400 = vmatprep.subr.mxu0 0.0
        %401 = vmatpush1.msra.mxu0 0.0
        %402 = vmatprep.subr.mxu0 0.0
        %403 = vmatpush1.msra.mxu0 0.0
        %404 = vmatprep.subr.mxu0 0.0
        %405 = vmatpush1.msra.mxu0 0.0
        %406 = vmatprep.subr.mxu0 0.0
        %407 = vmatpush1.msra.mxu0 0.0
        %408 = vmatprep.subr.mxu0 0.0
        %409 = vmatpush1.msra.mxu0 0.0
        %410 = vmatprep.subr.mxu0 0.0
        %411 = vmatpush1.msra.mxu0 0.0
        %412 = vmatprep.subr.mxu0 0.0
        %413 = vmatpush1.msra.mxu0 0.0
        %414 = vmatprep.subr.mxu0 0.0
        %415 = vmatpush1.msra.mxu0 0.0
        %416 = vmatprep.subr.mxu0 0.0
        %417 = vmatpush1.msra.mxu0 0.0
        %418 = vmatprep.subr.mxu0 0.0
        %419 = vmatpush1.msra.mxu0 0.0
        %420 = vmatprep.subr.mxu0 0.0
        %421 = vmatpush1.msra.mxu0 0.0
        %422 = vmatprep.subr.mxu0 0.0
        %423 = vmatpush1.msra.mxu0 0.0
        %424 = vmatprep.subr.mxu0 0.0
        %425 = vmatpush1.msra.mxu0 0.0
        %426 = vmatprep.subr.mxu0 0.0
        %427 = vmatpush1.msra.mxu0 0.0
        %428 = vmatprep.subr.mxu0 0.0
        %429 = vmatpush1.msra.mxu0 0.0
        %430 = vmatprep.subr.mxu0 0.0
        %431 = vmatpush1.msra.mxu0 0.0
        %432 = vmatprep.subr.mxu0 0.0
        %433 = vmatpush1.msra.mxu0 0.0
        %434 = vmatprep.subr.mxu0 0.0
        %435 = vmatpush1.msra.mxu0 0.0
        %436 = vmatprep.subr.mxu0 0.0
        %437 = vmatpush1.msra.mxu0 0.0
        %438 = vmatprep.subr.mxu0 0.0
        %439 = vmatpush1.msra.mxu0 0.0
        %440 = vmatprep.subr.mxu0 0.0
        %441 = vmatpush1.msra.mxu0 0.0
        %442 = vmatprep.subr.mxu0 0.0
        %443 = vmatpush1.msra.mxu0 0.0
        %444 = vmatprep.subr.mxu0 0.0
        %445 = vmatpush1.msra.mxu0 0.0
        %446 = vmatprep.subr.mxu0 0.0
        %447 = vmatpush1.msra.mxu0 0.0
        %448 = vmatprep.subr.mxu0 0.0
        %449 = vmatpush1.msra.mxu0 0.0
        %450 = vmatprep.subr.mxu0 0.0
        %451 = vmatpush1.msra.mxu0 0.0
        %452 = vmatprep.subr.mxu0 0.0
        %453 = vmatpush1.msra.mxu0 0.0
        %454 = vmatprep.subr.mxu0 0.0
        %455 = vmatpush1.msra.mxu0 0.0
        %456 = vmatprep.subr.mxu0 0.0
        %457 = vmatpush1.msra.mxu0 0.0
        %458 = vmatprep.subr.mxu0 0.0
        %459 = vmatpush1.msra.mxu0 0.0
        %460 = vmatprep.mubr.f32.mxu0 0.0
        %461 = vmatmul.mubr.f32.gmra.mrb[0].mxu0 %v394
        %v462 = vpop.f32.mrb[0].mxu0
        %v463 = vadd.f32 %v391, %v462
        %v464 = vpop.f32.mrb[0].mxu0
        %465 = vdwg.mxu0
        %v466 = vxor.u32 %v463, 2147483648
        %v467 = vmul.f32 %v466, 1.442695
        %v468 = vpow.pop %v467
        %v469 = vadd.f32 %v468, 1.0
        %v470 = vrcp.pop %v469
        %v471 = vmul.f32 1.0, %v470
        %v472 = vlaneseq
        %v473 = vshrl.u32 %v472, 7
        %v474 = vsub.s32 0, %v473
        %v475 = vrot.slane %v471, %v474
        %477 = vbcast.lane.b32.xlu0 %v475, 256
        %v478 = vpop.permute.xlu0 %477
        %s480 = sor.u32 256, 8
        %481 = vbcast.lane.b32.xlu0 %v475, %s480
        %v482 = vpop.permute.xlu0 %481
        %s484 = sor.u32 256, 16
        %485 = vbcast.lane.b32.xlu0 %v475, %s484
        %v486 = vpop.permute.xlu0 %485
        %s488 = sor.u32 256, 24
        %489 = vbcast.lane.b32.xlu0 %v475, %s488
        %v490 = vpop.permute.xlu0 %489
        %v491 = vmul.f32 %v256, %v478
        %v492 = vmul.f32 %v257, %v478
        %v493 = vmul.f32 %v258, %v482
        %v494 = vmul.f32 %v259, %v482
        %v495 = vmul.f32 %v260, %v486
        %v496 = vmul.f32 %v261, %v486
        %v497 = vmul.f32 %v262, %v490
        %v498 = vmul.f32 %v263, %v490
        %499 = vst [vmem:[%s255] sm:$0xff] %v491
        %500 = vst [vmem:[%s255 + $0x8] sm:$0xff] %v492
        %501 = vst [vmem:[%s255 + $0x10] sm:$0xff] %v493
        %502 = vst [vmem:[%s255 + $0x18] sm:$0xff] %v494
        %503 = vst [vmem:[%s255 + $0x20] sm:$0xff] %v495
        %504 = vst [vmem:[%s255 + $0x28] sm:$0xff] %v496
        %505 = vst [vmem:[%s255 + $0x30] sm:$0xff] %v497
        %506 = vst [vmem:[%s255 + $0x38] sm:$0xff] %v498
        %s507 = sand.u32 %s141, 1
        %s508 = scalar_lea.sflag [#allocation4], %s507
        %s509 = sand.u32 %s141, 1
        %s510 = smul.addr %s509, 64
        %s511 = scalar_lea.vmem [#allocation7], %s510
        // Predicated region
        $region49: #{tpu_custom_call.1} parent=39 // pred_check
          %p512 = pneg %p151
        $region50: #{tpu_custom_call.1} parent=39 // pred_check_branch
          %514 = sbr.rel (%p512) target = $region52
        $region51: #{tpu_custom_call.1} parent=39 // pred_region
          %s516 = ssub.s32 1024, 1024
          %517 = vsyncadd %s508, %s516
          %s518 = smul.addr %s23, 8
          %s519 = smul.addr %s518, 128
          %s520 = scalar_lea.hbm %s5, %s519
          %s521 = sshll.u32 %s511, 4
          %s522 = int_to_ptr.vmem [resolvable:$true] %s521
          %527 = dma.vmem_to_hbm [thread:$0]  %s522, 1024, %s520, %s508, 256, 256, 16
        $region52: #{tpu_custom_call.1} parent=39 // pred_fallthru
          _
      $region40: #{tpu_custom_call.1} parent=5 // pred_fallthru
        _
      %p528 = scmp.le.s32.totalorder 2, %s18
      // Predicated region
      $region53: #{tpu_custom_call.1} parent=5 // pred_check
        %p529 = pneg %p528
      $region54: #{tpu_custom_call.1} parent=5 // pred_check_branch
        %531 = sbr.rel (%p529) target = $region56
      $region55: #{tpu_custom_call.1} parent=5 // pred_region
        %s532 = ssub.s32 %s18, 2
        // Predicated region
        $region57: #{tpu_custom_call.1} parent=55 // pred_check
          %p533 = pneg %p157
        $region58: #{tpu_custom_call.1} parent=55 // pred_check_branch
          %535 = sbr.rel (%p533) target = $region60
        $region59: #{tpu_custom_call.1} parent=55 // pred_region
          %s536 = sand.u32 %s142, 1
          %s537 = scalar_lea.sflag [#allocation4], %s536
          %s538 = sand.u32 %s142, 1
          %s539 = smul.addr %s538, 64
          %s540 = scalar_lea.vmem [#allocation7], %s539
          %541 = dma.done %s537, 1024
        $region60: #{tpu_custom_call.1} parent=55 // pred_fallthru
          _
      $region56: #{tpu_custom_call.1} parent=5 // pred_fallthru
        _
    $region6: #{tpu_custom_call.1} parent=1 // loop_footer
      %s22 = sadd.s32 1, %s18
    $region7: #{tpu_custom_call.1} parent=1 // loop_footer_branch
      %17 = sbr.rel target = $region3
    $region8: #{tpu_custom_call.1} parent=1 // loop_exit
      _
    %542 = vsyncpa [#allocation3], 1
    %s543 = scalar_lea.sflag [#allocation3], 1
    %544 = vsyncpa %s543, 1
    %545 = vsyncpa [#allocation6], 1
    %546 = vsyncpa [#allocation4], 1
    %s547 = scalar_lea.sflag [#allocation4], 1
    %548 = vsyncpa %s547, 1

</llo_original>
